<compile_context>
chip_gen: v5e
topology: v5e:2x2
jax: 0.10.0
libtpu: 0.0.40
codegen_flags: <defaults>
</compile_context>

<pallas_src>
import functools

import jax
import jax.numpy as jnp
from jax.experimental import pallas as pl
from jax.experimental.pallas import tpu as pltpu


def _round_up(v, m):
    return (v + m - 1) // m * m


# ----------------------------------------------------------------------------
# Pallas kernel: one grid step == one layer (fc for l==0, GCNConv for l>0)
# ----------------------------------------------------------------------------
def _jknet_kernel(mode, x_ref, a_ref, w_ref, b_ref, out_ref, h_ref):
    l = pl.program_id(0)
    w = w_ref[0]                                   # [P, P]  bf16 (this layer)
    b = b_ref[0]                                   # [1, P]  f32

    @pl.when(l == 0)
    def _():
        # First layer: h = relu(x @ W_fc + b_fc)   (one MXU matmul)
        h0 = jnp.dot(x_ref[...], w, preferred_element_type=jnp.float32) + b
        h_ref[...] = jnp.maximum(h0, 0.0)

    @pl.when(l > 0)
    def _():
        # GCNConv: h = relu(A_hat @ (h @ W) + b)   (two MXU matmuls)
        xw = jnp.dot(h_ref[...].astype(jnp.bfloat16), w,
                     preferred_element_type=jnp.float32)
        hn = jnp.dot(a_ref[...], xw.astype(jnp.bfloat16),
                     preferred_element_type=jnp.float32) + b
        h_ref[...] = jnp.maximum(hn, 0.0)

    if mode == "cat":
        # Stream this layer's activation straight to its 128-wide output slab.
        out_ref[...] = h_ref[...]
    else:  # 'max': resident running element-wise max (same out block each step)
        @pl.when(l == 0)
        def _():
            out_ref[...] = h_ref[...]

        @pl.when(l > 0)
        def _():
            out_ref[...] = jnp.maximum(out_ref[...], h_ref[...])


def jknet_forward(x, a_hat, params, mode):
    """Fused JKNet forward. x: [N, nfeat] f32, a_hat: [N, N] f32."""
    mode = mode.lower()
    assert mode in ("cat", "max")
    n, nfeat = x.shape
    nh = params["w_fc"].shape[1]                   # per-layer hidden width
    nlayers = 1 + len(params["convs"])

    P = _round_up(max(nfeat, nh), 128)             # lane-dense hidden width
    Np = _round_up(n, 8)                           # sublane-aligned node count

    # Zero-pad + cast the matmul operands to bf16 (f32 accumulation in-kernel).
    x_p = jnp.zeros((Np, P), jnp.bfloat16).at[:n, :nfeat].set(
        x.astype(jnp.bfloat16))
    a_p = jnp.zeros((Np, Np), jnp.bfloat16).at[:n, :n].set(
        a_hat.astype(jnp.bfloat16))

    # Pack all layer weights / biases into single arrays -> 2 small DMAs/step.
    w_all = jnp.zeros((nlayers, P, P), jnp.bfloat16)
    b_all = jnp.zeros((nlayers, 1, P), jnp.float32)
    w_all = w_all.at[0, :nfeat, :nh].set(params["w_fc"].astype(jnp.bfloat16))
    b_all = b_all.at[0, :, :nh].set(params["b_fc"])
    for i, (w, b) in enumerate(params["convs"]):
        w_all = w_all.at[i + 1, :nh, :nh].set(w.astype(jnp.bfloat16))
        b_all = b_all.at[i + 1, :, :nh].set(b)

    out_cols = nlayers * P if mode == "cat" else P
    out_map = (lambda l: (0, l)) if mode == "cat" else (lambda l: (0, 0))

    # VMEM budget: resident A / x / h scratch + double-buffered W, b, out blocks.
    est = (a_p.size * 2 + x_p.size * 2 + Np * P * 4
           + 2 * (P * P * 2 + 8 * 128 * 4)
           + 2 * (Np * P * 4))
    vmem_limit = int(min(max(2 * est, 8 << 20), 48 << 20))

    kernel = functools.partial(_jknet_kernel, mode)
    out_padded = pl.pallas_call(
        kernel,
        out_shape=jax.ShapeDtypeStruct((Np, out_cols), jnp.float32),
        grid_spec=pltpu.PrefetchScalarGridSpec(
            num_scalar_prefetch=0,
            grid=(nlayers,),
            in_specs=[
                pl.BlockSpec((Np, P), lambda l: (0, 0)),        # x (resident)
                pl.BlockSpec((Np, Np), lambda l: (0, 0)),       # A_hat (resident)
                pl.BlockSpec((1, P, P), lambda l: (l, 0, 0)),   # W_l (pipelined)
                pl.BlockSpec((1, 1, P), lambda l: (l, 0, 0)),   # b_l (pipelined)
            ],
            out_specs=pl.BlockSpec((Np, P), out_map),
            scratch_shapes=[pltpu.VMEM((Np, P), jnp.float32)],  # activation h
        ),
        compiler_params=pltpu.CompilerParams(
            dimension_semantics=("arbitrary",),     # layers are sequential
            vmem_limit_bytes=vmem_limit),
    )(x_p, a_p, w_all, b_all)

    # Strip padding: keep true node rows and the true nh columns of each slab.
    if mode == "cat":
        return jnp.concatenate(
            [out_padded[:n, l * P:l * P + nh] for l in range(nlayers)], axis=-1)
    return out_padded[:n, :nh]


# ----------------------------------------------------------------------------
# Glue: GCN-normalized dense adjacency and deterministic parameter init
# ----------------------------------------------------------------------------
def build_gcn_adj(edge_index, n):
    """Dense A_hat matching PyG gcn_norm (add_self_loops=True, improved=False)."""
    src, dst = edge_index[0], edge_index[1]
    a = jnp.zeros((n, n), jnp.float32).at[dst, src].add(1.0)   # a[i, j]: edge j->i
    a = a + jnp.eye(n, dtype=jnp.float32)                      # self loops
    deg = a.sum(axis=1)
    dinv = jax.lax.rsqrt(deg)
    return dinv[:, None] * a * dinv[None, :]


def init_params(key, nfeat, nlayers, nhidden, mode):
    """Deterministic synthetic init; shapes follow JKNet.__init__."""
    mode = mode.lower()
    assert mode in ("cat", "max")
    if mode == "cat":
        assert nfeat % nlayers == 0      # mirrors the PyTorch module's assert
        assert nhidden % nlayers == 0    # guard the variable actually divided
        nhidden = nhidden // nlayers
    keys = jax.random.split(key, 2 * nlayers)
    w_fc = jax.random.normal(keys[0], (nfeat, nhidden), jnp.float32) / jnp.sqrt(
        jnp.float32(nfeat))
    b_fc = 0.01 * jax.random.normal(keys[1], (1, nhidden), jnp.float32)
    convs = []
    for i in range(nlayers - 1):         # GCNConv(nhidden, nhidden), bias=True
        w = jax.random.normal(keys[2 + 2 * i], (nhidden, nhidden),
                              jnp.float32) / jnp.sqrt(jnp.float32(nhidden))
        b = 0.01 * jax.random.normal(keys[3 + 2 * i], (1, nhidden), jnp.float32)
        convs.append((w, b))
    return dict(w_fc=w_fc, b_fc=b_fc, convs=convs)


def jknet_ref(x, a_hat, params, mode, bf16_inputs=False):
    """Pure-JAX reference (eval-mode forward); optionally mirrors bf16 inputs."""
    c = (lambda t: t.astype(jnp.bfloat16)) if bf16_inputs else (lambda t: t)
    a = c(a_hat)
    h = jax.nn.relu(
        jnp.dot(c(x), c(params["w_fc"]), preferred_element_type=jnp.float32)
        + params["b_fc"])
    layers = [h]
    for w, b in params["convs"]:
        xw = jnp.dot(c(h), c(w), preferred_element_type=jnp.float32)
        h = jax.nn.relu(
            jnp.dot(a, c(xw), preferred_element_type=jnp.float32) + b)
        layers.append(h)
    if mode.lower() == "cat":
        return jnp.concatenate(layers, axis=-1)
    return jnp.max(jnp.stack(layers, axis=-1), axis=-1)


# ----------------------------------------------------------------------------
if __name__ == "__main__":
    key = jax.random.PRNGKey(0)
    kx, kp = jax.random.split(key)

    N = 128           # number of graph nodes
    nfeat = 32        # input feature dim (divisible by nlayers for 'cat')
    nlayers = 4
    nhidden = 32

    x = jax.random.normal(kx, (N, nfeat), jnp.float32)

    # Deterministic undirected graph: ring edges + chord edges.
    idx = jnp.arange(N)
    src = jnp.concatenate([idx, (idx + 1) % N, idx, (idx + 5) % N])
    dst = jnp.concatenate([(idx + 1) % N, idx, (idx + 5) % N, idx])
    edge_index = jnp.stack([src, dst]).astype(jnp.int32)       # [2, 512]

    a_hat = build_gcn_adj(edge_index, N)

    for mode in ("cat", "max"):
        params = init_params(kp, nfeat, nlayers, nhidden, mode)
        out = jax.block_until_ready(jknet_forward(x, a_hat, params, mode))

        ref_mixed = jknet_ref(x, a_hat, params, mode, bf16_inputs=True)
        ref_f32 = jknet_ref(x, a_hat, params, mode, bf16_inputs=False)
        assert out.shape == ref_f32.shape, (out.shape, ref_f32.shape)
        # Tight check vs a reference that mirrors the kernel's bf16-in/f32-acc.
        assert jnp.allclose(out, ref_mixed, atol=2e-3, rtol=2e-3), (
            f"mismatch vs mixed-precision reference in mode={mode}")
        # Loose sanity check vs the pure-f32 module semantics.
        assert jnp.allclose(out, ref_f32, atol=1e-1, rtol=1e-1), (
            f"mismatch vs f32 reference in mode={mode}")

    print("KERNEL_OK")
</pallas_src>

<mosaic_0001>
module attributes {stable_mosaic.version = 11 : i64} {
  func.func @_jknet_kernel(%arg0: i32, %arg1: memref<128x128xbf16, #tpu.memory_space<vmem>>, %arg2: memref<128x128xbf16, #tpu.memory_space<vmem>>, %arg3: memref<1x128x128xbf16, #tpu.memory_space<vmem>>, %arg4: memref<1x1x128xf32, #tpu.memory_space<vmem>>, %arg5: memref<128x128xf32, #tpu.memory_space<vmem>>, %arg6: memref<128x128xf32, #tpu.memory_space<vmem>>) attributes {dimension_semantics = [#tpu.dimension_semantics<arbitrary>], iteration_bounds = array<i64: 4>, scalar_prefetch = 0 : i64, scratch_operands = 1 : i64, tpu.core_type = #tpu.core_type<tc>, window_params = [{pipeline_mode = #tpu.pipeline_mode<synchronous>, transform_indices = @transform_0, window_bounds = array<i64: 128, 128>}, {pipeline_mode = #tpu.pipeline_mode<synchronous>, transform_indices = @transform_1, window_bounds = array<i64: 128, 128>}, {transform_indices = @transform_2, window_bounds = array<i64: 1, 128, 128>}, {transform_indices = @transform_3, window_bounds = array<i64: 1, 1, 128>}, {transform_indices = @transform_4, window_bounds = array<i64: 128, 128>}]} {
    %c0 = arith.constant 0 : index
    %c0_0 = arith.constant 0 : index
    %c0_1 = arith.constant 0 : index
    %0 = vector.load %arg3[%c0, %c0_0, %c0_1] : memref<1x128x128xbf16, #tpu.memory_space<vmem>>, vector<1x128x128xbf16>
    %1 = vector.shape_cast %0 : vector<1x128x128xbf16> to vector<128x128xbf16>
    %c0_2 = arith.constant 0 : index
    %c0_3 = arith.constant 0 : index
    %c0_4 = arith.constant 0 : index
    %2 = vector.load %arg4[%c0_2, %c0_3, %c0_4] : memref<1x1x128xf32, #tpu.memory_space<vmem>>, vector<1x1x128xf32>
    %3 = vector.shape_cast %2 : vector<1x1x128xf32> to vector<1x128xf32>
    %c0_i32 = arith.constant 0 : i32
    %4 = arith.cmpi eq, %arg0, %c0_i32 : i32
    %5 = arith.extui %4 : i1 to i32
    %c0_i32_5 = arith.constant 0 : i32
    %6 = arith.cmpi ne, %5, %c0_i32_5 : i32
    scf.if %6 {
      %c0_12 = arith.constant 0 : index
      %c0_13 = arith.constant 0 : index
      %12 = vector.load %arg1[%c0_12, %c0_13] : memref<128x128xbf16, #tpu.memory_space<vmem>>, vector<128x128xbf16>
      %cst = arith.constant dense<0.000000e+00> : vector<128x128xf32>
      %13 = tpu.matmul %12, %1, %cst {dimension_numbers = #tpu.dot_dimension_numbers<[1], [0], [0], [1], [0, 0, 1, 1], [], []>} : vector<128x128xbf16>, vector<128x128xbf16>, vector<128x128xf32> -> vector<128x128xf32>
      %14 = vector.broadcast %3 : vector<1x128xf32> to vector<128x128xf32>
      %15 = arith.addf %13, %14 : vector<128x128xf32>
      %cst_14 = arith.constant 0.000000e+00 : f32
      %16 = vector.broadcast %cst_14 : f32 to vector<128x128xf32>
      %17 = arith.maximumf %15, %16 : vector<128x128xf32>
      %c0_15 = arith.constant 0 : index
      %c0_16 = arith.constant 0 : index
      %18 = vector.load %arg6[%c0_15, %c0_16] : memref<128x128xf32, #tpu.memory_space<vmem>>, vector<128x128xf32>
      tpu.vector_store %arg6[%c0_15, %c0_16], %17 {strides = array<i32>} : memref<128x128xf32, #tpu.memory_space<vmem>>, vector<128x128xf32>,
    } else {
    }
    %c0_i32_6 = arith.constant 0 : i32
    %7 = arith.cmpi sgt, %arg0, %c0_i32_6 : i32
    %8 = arith.extui %7 : i1 to i32
    %c0_i32_7 = arith.constant 0 : i32
    %9 = arith.cmpi ne, %8, %c0_i32_7 : i32
    scf.if %9 {
      %c0_12 = arith.constant 0 : index
      %c0_13 = arith.constant 0 : index
      %12 = vector.load %arg6[%c0_12, %c0_13] : memref<128x128xf32, #tpu.memory_space<vmem>>, vector<128x128xf32>
      %13 = arith.truncf %12 : vector<128x128xf32> to vector<128x128xbf16>
      %cst = arith.constant dense<0.000000e+00> : vector<128x128xf32>
      %14 = tpu.matmul %13, %1, %cst {dimension_numbers = #tpu.dot_dimension_numbers<[1], [0], [0], [1], [0, 0, 1, 1], [], []>} : vector<128x128xbf16>, vector<128x128xbf16>, vector<128x128xf32> -> vector<128x128xf32>
      %c0_14 = arith.constant 0 : index
      %c0_15 = arith.constant 0 : index
      %15 = vector.load %arg2[%c0_14, %c0_15] : memref<128x128xbf16, #tpu.memory_space<vmem>>, vector<128x128xbf16>
      %16 = arith.truncf %14 : vector<128x128xf32> to vector<128x128xbf16>
      %cst_16 = arith.constant dense<0.000000e+00> : vector<128x128xf32>
      %17 = tpu.matmul %15, %16, %cst_16 {dimension_numbers = #tpu.dot_dimension_numbers<[1], [0], [0], [1], [0, 0, 1, 1], [], []>} : vector<128x128xbf16>, vector<128x128xbf16>, vector<128x128xf32> -> vector<128x128xf32>
      %18 = vector.broadcast %3 : vector<1x128xf32> to vector<128x128xf32>
      %19 = arith.addf %17, %18 : vector<128x128xf32>
      %cst_17 = arith.constant 0.000000e+00 : f32
      %20 = vector.broadcast %cst_17 : f32 to vector<128x128xf32>
      %21 = arith.maximumf %19, %20 : vector<128x128xf32>
      %c0_18 = arith.constant 0 : index
      %c0_19 = arith.constant 0 : index
      %22 = vector.load %arg6[%c0_18, %c0_19] : memref<128x128xf32, #tpu.memory_space<vmem>>, vector<128x128xf32>
      tpu.vector_store %arg6[%c0_18, %c0_19], %21 {strides = array<i32>} : memref<128x128xf32, #tpu.memory_space<vmem>>, vector<128x128xf32>,
    } else {
    }
    %c0_8 = arith.constant 0 : index
    %c0_9 = arith.constant 0 : index
    %10 = vector.load %arg6[%c0_8, %c0_9] : memref<128x128xf32, #tpu.memory_space<vmem>>, vector<128x128xf32>
    %c0_10 = arith.constant 0 : index
    %c0_11 = arith.constant 0 : index
    %11 = vector.load %arg5[%c0_10, %c0_11] : memref<128x128xf32, #tpu.memory_space<vmem>>, vector<128x128xf32>
    tpu.vector_store %arg5[%c0_10, %c0_11], %10 {strides = array<i32>} : memref<128x128xf32, #tpu.memory_space<vmem>>, vector<128x128xf32>,
    return
  }
  func.func @transform_0(%arg0: i32) -> (i32, i32) {
    %c0_i32 = arith.constant 0 : i32
    %c0_i32_0 = arith.constant 0 : i32
    %c0_i32_1 = arith.constant 0 : i32
    return %c0_i32, %c0_i32_0 : i32, i32
  }
  func.func @transform_1(%arg0: i32) -> (i32, i32) {
    %c0_i32 = arith.constant 0 : i32
    %c0_i32_0 = arith.constant 0 : i32
    %c0_i32_1 = arith.constant 0 : i32
    return %c0_i32, %c0_i32_0 : i32, i32
  }
  func.func @transform_2(%arg0: i32) -> (i32, i32, i32) {
    %c0_i32 = arith.constant 0 : i32
    %c0_i32_0 = arith.constant 0 : i32
    %c0_i32_1 = arith.constant 0 : i32
    return %arg0, %c0_i32, %c0_i32_0 : i32, i32, i32
  }
  func.func @transform_3(%arg0: i32) -> (i32, i32, i32) {
    %c0_i32 = arith.constant 0 : i32
    %c0_i32_0 = arith.constant 0 : i32
    %c0_i32_1 = arith.constant 0 : i32
    return %arg0, %c0_i32, %c0_i32_0 : i32, i32, i32
  }
  func.func @transform_4(%arg0: i32) -> (i32, i32) {
    %c0_i32 = arith.constant 0 : i32
    %c0_i32_0 = arith.constant 0 : i32
    return %c0_i32, %arg0 : i32, i32
  }
}

</mosaic_0001>

<llo_original>
// kernel: tpu_custom_call.1
$region0: #{tpu_custom_call.1}
  #allocation0 [shape = 'u32[]', space=smem, size = 0x4, offset = 0x4, fixed_abs, tag = 'smem constant byte address 0x4 - core index']
  #allocation1 [shape = 'u32[72,128]{1,0:T(1,128)}', space=vmem, size = 0x9000, scoped, tag = 'internal scratch']
  #allocation2 [shape = 'f32[128,128]{1,0:T(8,128)}', space=vmem, size = 0x10000, scoped, tag = 'scratch operand']
  %s0 = inlined_call_operand.hbm [shape: bf16[128,128], index: 0, kind: input, shape index: {}]
  %s1 = inlined_call_operand.hbm [shape: bf16[128,128], index: 1, kind: input, shape index: {}]
  %s2 = inlined_call_operand.hbm [shape: bf16[4,128,128], index: 2, kind: input, shape index: {}]
  %s3 = inlined_call_operand.hbm [shape: f32[4,1,128], index: 3, kind: input, shape index: {}]
  %s4 = inlined_call_operand.hbm [shape: f32[128,512], index: 4, kind: output, shape index: {}]
  %s5 = sld [smem:[#allocation0]]
  $region73: #{tpu_custom_call.1} parent=0
    _
  %s7 = ssub.s32 1, %s5
  %s8 = scalar_select 0, %s7, %s5
  $region1: #{tpu_custom_call.1} parent=0
    #allocation3 [shape = 'u8[32768]{0}', space=vmem, size = 0x8000, scoped, tag = 'input window, operand 0, single buffered']
    #allocation4 [shape = 's32[2]{0}', space=sflag, size = 0x8, scoped, tag = 'scoped memory for tpu_custom_call.1']
    #allocation5 [shape = 's32[2]{0}', space=sflag, size = 0x8, scoped, tag = 'scoped memory for tpu_custom_call.1']
    #allocation6 [shape = 'u8[32768]{0}', space=vmem, size = 0x8000, scoped, tag = 'input window, operand 1, single buffered']
    #allocation7 [shape = 's32[1]{0}', space=sflag, size = 0x4, scoped, tag = 'scoped memory for tpu_custom_call.1']
    #allocation8 [shape = 'u8[65536]{0}', space=vmem, size = 0x10000, scoped, tag = 'input window, operand 2']
    #allocation9 [shape = 'u8[1024]{0}', space=vmem, size = 0x400, scoped, tag = 'input window, operand 3']
    #allocation10 [shape = 'u8[131072]{0}', space=vmem, size = 0x20000, scoped, tag = 'output window, operand 0']
    %9 = vsyncpa [#allocation4], 0
    %10 = vsyncpa [#allocation7], 0
    %11 = vsyncpa [#allocation5], 0
    %s12 = scalar_lea.sflag [#allocation5], 1
    %13 = vsyncpa %s12, 0
    loop: start=0, step=1, limit=6
    $region2: #{tpu_custom_call.1} parent=1 // loop_pre_header
      _
    $region3: #{tpu_custom_call.1} parent=1 // loop_header
      %s15 = sphi 0, %s19
      %p16 = scmp.ge.s32.totalorder %s15, 6
      %s23 = sphi 0, %s23
      %s25 = sphi 0, %s23
      %s26 = sphi 0, %s25
      %s40 = sphi 0, %s26
      %s44 = sphi 0, %s44
      %s46 = sphi 0, %s44
      %s47 = sphi 0, %s46
      %s61 = sphi 0, %s47
      %s67 = sphi 0, %s69
      %s70 = sphi 0, %s67
      %s71 = sphi 0, %s70
      %s87 = sphi 0, %s71
      %s93 = sphi 0, %s95
      %s96 = sphi 0, %s93
      %s97 = sphi 0, %s96
      %s113 = sphi 0, %s97
      %s119 = sphi 0, %s121
      %s122 = sphi 0, %s119
      %s123 = sphi 0, %s122
      %s139 = sphi 0, %s123
    $region4: #{tpu_custom_call.1} parent=1 // loop_header_branch
      %18 = sbr.rel (%p16) target = $region8
    $region5: #{tpu_custom_call.1} parent=1 // loop_body
      %s20 = ssub.s32 %s15, 1
      %s21 = ssub.s32 %s15, 2
      %s22 = sadd.s32 %s15, 1
      %s24 = sadd.s32 %s23, 1
      %p27 = scmp.eq.s32.totalorder %s15, 3
      %p28 = scmp.ne.s32.totalorder %s23, %s25
      %p29 = scmp.eq.s32.totalorder %s15, 0
      %p30 = por %p28, %p29
      %p31 = scmp.ne.s32.totalorder %s23, %s25
      %p32 = scmp.eq.s32.totalorder %s20, 3
      %p33 = por %p31, %p32
      %p34 = scmp.ne.s32.totalorder %s25, %s26
      %p35 = scmp.eq.s32.totalorder %s20, 0
      %p36 = por %p34, %p35
      %p37 = scmp.ne.s32.totalorder %s25, %s26
      %p38 = scmp.eq.s32.totalorder %s21, 3
      %p39 = por %p37, %p38
      %p41 = scmp.ne.s32.totalorder %s26, %s40
      %p42 = scmp.eq.s32.totalorder %s21, 0
      %p43 = por %p41, %p42
      %s45 = sadd.s32 %s44, 1
      %p48 = scmp.eq.s32.totalorder %s15, 3
      %p49 = scmp.ne.s32.totalorder %s44, %s46
      %p50 = scmp.eq.s32.totalorder %s15, 0
      %p51 = por %p49, %p50
      %p52 = scmp.ne.s32.totalorder %s44, %s46
      %p53 = scmp.eq.s32.totalorder %s20, 3
      %p54 = por %p52, %p53
      %p55 = scmp.ne.s32.totalorder %s46, %s47
      %p56 = scmp.eq.s32.totalorder %s20, 0
      %p57 = por %p55, %p56
      %p58 = scmp.ne.s32.totalorder %s46, %s47
      %p59 = scmp.eq.s32.totalorder %s21, 3
      %p60 = por %p58, %p59
      %p62 = scmp.ne.s32.totalorder %s47, %s61
      %p63 = scmp.eq.s32.totalorder %s21, 0
      %p64 = por %p62, %p63
      %s65 = ssub.s32 %s15, %s22
      %p66 = scmp.eq.s32.totalorder %s65, 0
      %s68 = sadd.s32 %s67, 1
      %s69 = scalar_select %p66, %s67, %s68
      %p72 = pneg %p66
      %p73 = scmp.eq.s32.totalorder %s15, 3
      %p74 = por %p72, %p73
      %p75 = scmp.ne.s32.totalorder %s67, %s70
      %p76 = scmp.eq.s32.totalorder %s15, 0
      %p77 = por %p75, %p76
      %p78 = scmp.ne.s32.totalorder %s67, %s70
      %p79 = scmp.eq.s32.totalorder %s20, 3
      %p80 = por %p78, %p79
      %p81 = scmp.ne.s32.totalorder %s70, %s71
      %p82 = scmp.eq.s32.totalorder %s20, 0
      %p83 = por %p81, %p82
      %p84 = scmp.ne.s32.totalorder %s70, %s71
      %p85 = scmp.eq.s32.totalorder %s21, 3
      %p86 = por %p84, %p85
      %p88 = scmp.ne.s32.totalorder %s71, %s87
      %p89 = scmp.eq.s32.totalorder %s21, 0
      %p90 = por %p88, %p89
      %s91 = ssub.s32 %s15, %s22
      %p92 = scmp.eq.s32.totalorder %s91, 0
      %s94 = sadd.s32 %s93, 1
      %s95 = scalar_select %p92, %s93, %s94
      %p98 = pneg %p92
      %p99 = scmp.eq.s32.totalorder %s15, 3
      %p100 = por %p98, %p99
      %p101 = scmp.ne.s32.totalorder %s93, %s96
      %p102 = scmp.eq.s32.totalorder %s15, 0
      %p103 = por %p101, %p102
      %p104 = scmp.ne.s32.totalorder %s93, %s96
      %p105 = scmp.eq.s32.totalorder %s20, 3
      %p106 = por %p104, %p105
      %p107 = scmp.ne.s32.totalorder %s96, %s97
      %p108 = scmp.eq.s32.totalorder %s20, 0
      %p109 = por %p107, %p108
      %p110 = scmp.ne.s32.totalorder %s96, %s97
      %p111 = scmp.eq.s32.totalorder %s21, 3
      %p112 = por %p110, %p111
      %p114 = scmp.ne.s32.totalorder %s97, %s113
      %p115 = scmp.eq.s32.totalorder %s21, 0
      %p116 = por %p114, %p115
      %s117 = ssub.s32 %s15, %s22
      %p118 = scmp.eq.s32.totalorder %s117, 0
      %s120 = sadd.s32 %s119, 1
      %s121 = scalar_select %p118, %s119, %s120
      %p124 = pneg %p118
      %p125 = scmp.eq.s32.totalorder %s15, 3
      %p126 = por %p124, %p125
      %p127 = scmp.ne.s32.totalorder %s119, %s122
      %p128 = scmp.eq.s32.totalorder %s15, 0
      %p129 = por %p127, %p128
      %p130 = scmp.ne.s32.totalorder %s119, %s122
      %p131 = scmp.eq.s32.totalorder %s20, 3
      %p132 = por %p130, %p131
      %p133 = scmp.ne.s32.totalorder %s122, %s123
      %p134 = scmp.eq.s32.totalorder %s20, 0
      %p135 = por %p133, %p134
      %p136 = scmp.ne.s32.totalorder %s122, %s123
      %p137 = scmp.eq.s32.totalorder %s21, 3
      %p138 = por %p136, %p137
      %p140 = scmp.ne.s32.totalorder %s123, %s139
      %p141 = scmp.eq.s32.totalorder %s21, 0
      %p142 = por %p140, %p141
      %p143 = scmp.le.s32.totalorder 1, %s15
      %p144 = scmp.lt.s32.totalorder %s15, 5
      %p145 = pnand %p143, %p144
      %p146 = pneg %p145
      // Predicated region
      $region9: #{tpu_custom_call.1} parent=5 // pred_check
        _
      $region10: #{tpu_custom_call.1} parent=5 // pred_check_branch
        %148 = sbr.rel (%p145) target = $region12
      $region11: #{tpu_custom_call.1} parent=5 // pred_region
        %s149 = ssub.s32 %s15, 1
        // Predicated region
        $region13: #{tpu_custom_call.1} parent=11 // pred_check
          %p150 = pneg %p36
        $region14: #{tpu_custom_call.1} parent=11 // pred_check_branch
          %152 = sbr.rel (%p150) target = $region16
        $region15: #{tpu_custom_call.1} parent=11 // pred_region
          %154 = vsyncadd [#allocation4], 0
          %s155 = sshll.u32 %s0, 4
          %s156 = int_to_ptr.hbm [resolvable:$true] %s155
          %s157 = sshll.u32 [#allocation3], 4
          %s158 = int_to_ptr.vmem [resolvable:$true] %s157
          %163 = dma.hbm_to_vmem [thread:$0]  %s156, 1024, %s158, [#allocation4], 64, 64, 4
        $region16: #{tpu_custom_call.1} parent=11 // pred_fallthru
          _
        // Predicated region
        $region17: #{tpu_custom_call.1} parent=11 // pred_check
          %p164 = pneg %p57
        $region18: #{tpu_custom_call.1} parent=11 // pred_check_branch
          %166 = sbr.rel (%p164) target = $region20
        $region19: #{tpu_custom_call.1} parent=11 // pred_region
          %168 = vsyncadd [#allocation7], 0
          %s169 = sshll.u32 %s1, 4
          %s170 = int_to_ptr.hbm [resolvable:$true] %s169
          %s171 = sshll.u32 [#allocation6], 4
          %s172 = int_to_ptr.vmem [resolvable:$true] %s171
          %177 = dma.hbm_to_vmem [thread:$0]  %s170, 1024, %s172, [#allocation7], 64, 64, 4
        $region20: #{tpu_custom_call.1} parent=11 // pred_fallthru
          _
      $region12: #{tpu_custom_call.1} parent=5 // pred_fallthru
        _
      %p178 = scmp.lt.s32.totalorder %s15, 4
      // Predicated region
      $region21: #{tpu_custom_call.1} parent=5 // pred_check
        %p179 = pneg %p178
      $region22: #{tpu_custom_call.1} parent=5 // pred_check_branch
        %181 = sbr.rel (%p179) target = $region24
      $region23: #{tpu_custom_call.1} parent=5 // pred_region
        // Predicated region
        $region25: #{tpu_custom_call.1} parent=23 // pred_check
          %p182 = pneg %p77
        $region26: #{tpu_custom_call.1} parent=23 // pred_check_branch
          %184 = sbr.rel (%p182) target = $region28
        $region27: #{tpu_custom_call.1} parent=23 // pred_region
          %s185 = sand.u32 %s15, 1
          %s186 = scalar_lea.sflag [#allocation4], %s185
          %s187 = sand.u32 %s67, 1
          %s188 = smul.addr %s187, 64
          %s189 = scalar_lea.vmem [#allocation8], %s188
          %191 = vsyncadd %s186, 0
          %s192 = smul.addr %s15, 16
          %s193 = smul.addr %s192, 4
          %s194 = scalar_lea.hbm %s2, %s193
          %s195 = sshll.u32 %s194, 4
          %s196 = int_to_ptr.hbm [resolvable:$true] %s195
          %s197 = sshll.u32 %s189, 4
          %s198 = int_to_ptr.vmem [resolvable:$true] %s197
          %203 = dma.hbm_to_vmem [thread:$0]  %s196, 1024, %s198, %s186, 64, 64, 4
        $region28: #{tpu_custom_call.1} parent=23 // pred_fallthru
          _
        // Predicated region
        $region29: #{tpu_custom_call.1} parent=23 // pred_check
          %p204 = pneg %p103
        $region30: #{tpu_custom_call.1} parent=23 // pred_check_branch
          %206 = sbr.rel (%p204) target = $region32
        $region31: #{tpu_custom_call.1} parent=23 // pred_region
          %s207 = sand.u32 %s15, 1
          %s208 = scalar_lea.sflag [#allocation4], %s207
          %s209 = sand.u32 %s93, 1
          %s210 = scalar_lea.vmem [#allocation9], %s209
          %212 = vsyncadd %s208, 0
          %s213 = scalar_lea.hbm %s3, %s15
          %s215 = sshll.u32 %s213, 4
          %s216 = int_to_ptr.hbm [resolvable:$true] %s215
          %s217 = sshll.u32 %s210, 4
          %s218 = int_to_ptr.vmem [resolvable:$true] %s217
          %220 = dma.hbm_to_vmem [thread:$0]  %s216, 16, %s218, %s208
        $region32: #{tpu_custom_call.1} parent=23 // pred_fallthru
          _
      $region24: #{tpu_custom_call.1} parent=5 // pred_fallthru
        _
      %p221 = scmp.le.s32.totalorder 1, %s15
      %p222 = scmp.lt.s32.totalorder %s15, 5
      %p223 = pnand %p221, %p222
      %p224 = pneg %p223
      // Predicated region
      $region33: #{tpu_custom_call.1} parent=5 // pred_check
        _
      $region34: #{tpu_custom_call.1} parent=5 // pred_check_branch
        %226 = sbr.rel (%p223) target = $region36
      $region35: #{tpu_custom_call.1} parent=5 // pred_region
        %s227 = ssub.s32 %s15, 1
        // Predicated region
        $region37: #{tpu_custom_call.1} parent=35 // pred_check
          %p228 = pneg %p36
        $region38: #{tpu_custom_call.1} parent=35 // pred_check_branch
          %230 = sbr.rel (%p228) target = $region40
        $region39: #{tpu_custom_call.1} parent=35 // pred_region
          %232 = dma.done [#allocation4], 1024
        $region40: #{tpu_custom_call.1} parent=35 // pred_fallthru
          _
        // Predicated region
        $region41: #{tpu_custom_call.1} parent=35 // pred_check
          %p233 = pneg %p57
        $region42: #{tpu_custom_call.1} parent=35 // pred_check_branch
          %235 = sbr.rel (%p233) target = $region44
        $region43: #{tpu_custom_call.1} parent=35 // pred_region
          %237 = dma.done [#allocation7], 1024
        $region44: #{tpu_custom_call.1} parent=35 // pred_fallthru
          _
        %s238 = sand.u32 %s20, 1
        %s239 = scalar_lea.sflag [#allocation4], %s238
        %s240 = sand.u32 %s70, 1
        %s241 = smul.addr %s240, 64
        %s242 = scalar_lea.vmem [#allocation8], %s241
        // Predicated region
        $region45: #{tpu_custom_call.1} parent=35 // pred_check
          %p243 = pneg %p83
        $region46: #{tpu_custom_call.1} parent=35 // pred_check_branch
          %245 = sbr.rel (%p243) target = $region48
        $region47: #{tpu_custom_call.1} parent=35 // pred_region
          %247 = dma.done %s239, 1024
        $region48: #{tpu_custom_call.1} parent=35 // pred_fallthru
          _
        %s248 = sand.u32 %s20, 1
        %s249 = scalar_lea.sflag [#allocation4], %s248
        %s250 = sand.u32 %s96, 1
        %s251 = scalar_lea.vmem [#allocation9], %s250
        // Predicated region
        $region49: #{tpu_custom_call.1} parent=35 // pred_check
          %p252 = pneg %p109
        $region50: #{tpu_custom_call.1} parent=35 // pred_check_branch
          %254 = sbr.rel (%p252) target = $region52
        $region51: #{tpu_custom_call.1} parent=35 // pred_region
          %256 = dma.done %s249, 16
        $region52: #{tpu_custom_call.1} parent=35 // pred_fallthru
          _
        %p257 = pneg %p36
        %p258 = pneg %p33
        %p259 = pneg %p57
        %p260 = pneg %p54
        %s261 = sand.u32 %s20, 1
        %s262 = scalar_lea.sflag [#allocation4], %s261
        %s263 = sand.u32 %s70, 1
        %s264 = smul.addr %s263, 64
        %s265 = scalar_lea.vmem [#allocation8], %s264
        %p266 = pneg %p83
        %p267 = pneg %p80
        %s268 = sand.u32 %s20, 1
        %s269 = scalar_lea.sflag [#allocation4], %s268
        %s270 = sand.u32 %s96, 1
        %s271 = scalar_lea.vmem [#allocation9], %s270
        %p272 = pneg %p109
        %p273 = pneg %p106
        %p274 = pneg %p135
        %p275 = pneg %p132
        %s276 = sand.u32 %s122, 1
        %s277 = scalar_lea.sflag [#allocation5], %s276
        %s278 = sand.u32 %s122, 1
        %s279 = smul.addr %s278, 128
        %s280 = scalar_lea.vmem [#allocation10], %s279
        %v281 = vld [vmem:[%s242] sm:$0xf]
        %v282 = vld [vmem:[%s242 + $0x4] sm:$0xf]
        %v283 = vld [vmem:[%s242 + $0x8] sm:$0xf]
        %v284 = vld [vmem:[%s242 + $0xc] sm:$0xf]
        %v285 = vld [vmem:[%s242 + $0x10] sm:$0xf]
        %v286 = vld [vmem:[%s242 + $0x14] sm:$0xf]
        %v287 = vld [vmem:[%s242 + $0x18] sm:$0xf]
        %v288 = vld [vmem:[%s242 + $0x1c] sm:$0xf]
        %v289 = vld [vmem:[%s242 + $0x20] sm:$0xf]
        %v290 = vld [vmem:[%s242 + $0x24] sm:$0xf]
        %v291 = vld [vmem:[%s242 + $0x28] sm:$0xf]
        %v292 = vld [vmem:[%s242 + $0x2c] sm:$0xf]
        %v293 = vld [vmem:[%s242 + $0x30] sm:$0xf]
        %v294 = vld [vmem:[%s242 + $0x34] sm:$0xf]
        %v295 = vld [vmem:[%s242 + $0x38] sm:$0xf]
        %v296 = vld [vmem:[%s242 + $0x3c] sm:$0xf]
        %v297 = vld [vmem:[%s251] sm:$0x1]
        %p298 = scmp.eq.s32.totalorder %s20, 0
        // Predicated region
        $region53: #{tpu_custom_call.1} parent=35 // pred_check
          %p299 = pneg %p298
        $region54: #{tpu_custom_call.1} parent=35 // pred_check_branch
          %301 = sbr.rel (%p299) target = $region56
        $region55: #{tpu_custom_call.1} parent=35 // pred_region
          %v302 = vld [vmem:[#allocation3] sm:$0xf]
          %v303 = vld [vmem:[#allocation3 + $0x4] sm:$0xf]
          %v304 = vld [vmem:[#allocation3 + $0x8] sm:$0xf]
          %v305 = vld [vmem:[#allocation3 + $0xc] sm:$0xf]
          %v306 = vld [vmem:[#allocation3 + $0x10] sm:$0xf]
          %v307 = vld [vmem:[#allocation3 + $0x14] sm:$0xf]
          %v308 = vld [vmem:[#allocation3 + $0x18] sm:$0xf]
          %v309 = vld [vmem:[#allocation3 + $0x1c] sm:$0xf]
          %v310 = vld [vmem:[#allocation3 + $0x20] sm:$0xf]
          %v311 = vld [vmem:[#allocation3 + $0x24] sm:$0xf]
          %v312 = vld [vmem:[#allocation3 + $0x28] sm:$0xf]
          %v313 = vld [vmem:[#allocation3 + $0x2c] sm:$0xf]
          %v314 = vld [vmem:[#allocation3 + $0x30] sm:$0xf]
          %v315 = vld [vmem:[#allocation3 + $0x34] sm:$0xf]
          %v316 = vld [vmem:[#allocation3 + $0x38] sm:$0xf]
          %v317 = vld [vmem:[#allocation3 + $0x3c] sm:$0xf]
          %v319 = vperm.slane %v297, 0
          %v337 = vunpack.c.l.b16 %v302
          %v338 = vunpack.c.l.b16 %v303
          %v339 = vunpack.c.l.b16 %v304
          %v340 = vunpack.c.l.b16 %v305
          %v341 = vunpack.c.l.b16 %v306
          %v342 = vunpack.c.l.b16 %v307
          %v343 = vunpack.c.l.b16 %v308
          %v344 = vunpack.c.l.b16 %v309
          %v345 = vunpack.c.l.b16 %v310
          %v346 = vunpack.c.l.b16 %v311
          %v347 = vunpack.c.l.b16 %v312
          %v348 = vunpack.c.l.b16 %v313
          %v349 = vunpack.c.l.b16 %v314
          %v350 = vunpack.c.l.b16 %v315
          %v351 = vunpack.c.l.b16 %v316
          %v352 = vunpack.c.l.b16 %v317
          %v353 = vpack.c.b16 %v338, %v337
          %v354 = vpack.c.b16 %v340, %v339
          %v355 = vpack.c.b16 %v342, %v341
          %v356 = vpack.c.b16 %v344, %v343
          %v357 = vpack.c.b16 %v346, %v345
          %v358 = vpack.c.b16 %v348, %v347
          %v359 = vpack.c.b16 %v350, %v349
          %v360 = vpack.c.b16 %v352, %v351
          %v385 = vunpack.c.l.b16 %v281
          %v386 = vunpack.c.l.b16 %v282
          %v387 = vunpack.c.l.b16 %v283
          %v388 = vunpack.c.l.b16 %v284
          %v389 = vunpack.c.l.b16 %v285
          %v390 = vunpack.c.l.b16 %v286
          %v391 = vunpack.c.l.b16 %v287
          %v392 = vunpack.c.l.b16 %v288
          %v393 = vunpack.c.l.b16 %v289
          %v394 = vunpack.c.l.b16 %v290
          %v395 = vunpack.c.l.b16 %v291
          %v396 = vunpack.c.l.b16 %v292
          %v397 = vunpack.c.l.b16 %v293
          %v398 = vunpack.c.l.b16 %v294
          %v399 = vunpack.c.l.b16 %v295
          %v400 = vunpack.c.l.b16 %v296
          %v401 = vpack.c.b16 %v386, %v385
          %v402 = vpack.c.b16 %v388, %v387
          %v403 = vpack.c.b16 %v390, %v389
          %v404 = vpack.c.b16 %v392, %v391
          %v405 = vpack.c.b16 %v394, %v393
          %v406 = vpack.c.b16 %v396, %v395
          %v407 = vpack.c.b16 %v398, %v397
          %v408 = vpack.c.b16 %v400, %v399
          %417 = vmatpush.bf16.msra.mxu0 %v408
          %418 = vmatpush.bf16.msra.mxu0 %v407
          %419 = vmatpush.bf16.msra.mxu0 %v406
          %420 = vmatpush.bf16.msra.mxu0 %v405
          %421 = vmatpush.bf16.msra.mxu0 %v404
          %422 = vmatpush.bf16.msra.mxu0 %v403
          %423 = vmatpush.bf16.msra.mxu0 %v402
          %424 = vmatpush.bf16.msra.mxu0 %v401
          %425 = vmatmul.bf16.gmra.mxu0 %v353
          %v426 = vpop.f32.mrf.mxu0
          %v427 = vadd.f32 %v319, %v426
          %v428 = vpop.f32.mrf.mxu0
          %v429 = vadd.f32 %v319, %v428
          %430 = vmatmul.bf16.gmra.mxu0 %v354
          %v431 = vpop.f32.mrf.mxu0
          %v432 = vadd.f32 %v319, %v431
          %v433 = vpop.f32.mrf.mxu0
          %v434 = vadd.f32 %v319, %v433
          %435 = vmatmul.bf16.gmra.mxu0 %v355
          %v436 = vpop.f32.mrf.mxu0
          %v437 = vadd.f32 %v319, %v436
          %v438 = vpop.f32.mrf.mxu0
          %v439 = vadd.f32 %v319, %v438
          %440 = vmatmul.bf16.gmra.mxu0 %v356
          %v441 = vpop.f32.mrf.mxu0
          %v442 = vadd.f32 %v319, %v441
          %v443 = vpop.f32.mrf.mxu0
          %v444 = vadd.f32 %v319, %v443
          %445 = vmatmul.bf16.gmra.mxu0 %v357
          %v446 = vpop.f32.mrf.mxu0
          %v447 = vadd.f32 %v319, %v446
          %v448 = vpop.f32.mrf.mxu0
          %v449 = vadd.f32 %v319, %v448
          %450 = vmatmul.bf16.gmra.mxu0 %v358
          %v451 = vpop.f32.mrf.mxu0
          %v452 = vadd.f32 %v319, %v451
          %v453 = vpop.f32.mrf.mxu0
          %v454 = vadd.f32 %v319, %v453
          %455 = vmatmul.bf16.gmra.mxu0 %v359
          %v456 = vpop.f32.mrf.mxu0
          %v457 = vadd.f32 %v319, %v456
          %v458 = vpop.f32.mrf.mxu0
          %v459 = vadd.f32 %v319, %v458
          %460 = vmatmul.bf16.gmra.mxu0 %v360
          %v461 = vpop.f32.mrf.mxu0
          %v462 = vadd.f32 %v319, %v461
          %v463 = vpop.f32.mrf.mxu0
          %v464 = vadd.f32 %v319, %v463
          %465 = vdwg.mxu0
          %v466 = vmax.f32 %v427, 0.0
          %v467 = vmax.f32 %v429, 0.0
          %v468 = vmax.f32 %v432, 0.0
          %v469 = vmax.f32 %v434, 0.0
          %v470 = vmax.f32 %v437, 0.0
          %v471 = vmax.f32 %v439, 0.0
          %v472 = vmax.f32 %v442, 0.0
          %v473 = vmax.f32 %v444, 0.0
          %v474 = vmax.f32 %v447, 0.0
          %v475 = vmax.f32 %v449, 0.0
          %v476 = vmax.f32 %v452, 0.0
          %v477 = vmax.f32 %v454, 0.0
          %v478 = vmax.f32 %v457, 0.0
          %v479 = vmax.f32 %v459, 0.0
          %v480 = vmax.f32 %v462, 0.0
          %v481 = vmax.f32 %v464, 0.0
          %482 = vst [vmem:[#allocation2] sm:$0xff] %v466
          %483 = vst [vmem:[#allocation2 + $0x8] sm:$0xff] %v467
          %484 = vst [vmem:[#allocation2 + $0x10] sm:$0xff] %v468
          %485 = vst [vmem:[#allocation2 + $0x18] sm:$0xff] %v469
          %486 = vst [vmem:[#allocation2 + $0x20] sm:$0xff] %v470
          %487 = vst [vmem:[#allocation2 + $0x28] sm:$0xff] %v471
          %488 = vst [vmem:[#allocation2 + $0x30] sm:$0xff] %v472
          %489 = vst [vmem:[#allocation2 + $0x38] sm:$0xff] %v473
          %490 = vst [vmem:[#allocation2 + $0x40] sm:$0xff] %v474
          %491 = vst [vmem:[#allocation2 + $0x48] sm:$0xff] %v475
          %492 = vst [vmem:[#allocation2 + $0x50] sm:$0xff] %v476
          %493 = vst [vmem:[#allocation2 + $0x58] sm:$0xff] %v477
          %494 = vst [vmem:[#allocation2 + $0x60] sm:$0xff] %v478
          %495 = vst [vmem:[#allocation2 + $0x68] sm:$0xff] %v479
          %496 = vst [vmem:[#allocation2 + $0x70] sm:$0xff] %v480
          %497 = vst [vmem:[#allocation2 + $0x78] sm:$0xff] %v481
        $region56: #{tpu_custom_call.1} parent=35 // pred_fallthru
          _
        %p498 = scmp.gt.s32.totalorder %s20, 0
        // Predicated region
        $region57: #{tpu_custom_call.1} parent=35 // pred_check
          %p499 = pneg %p498
        $region58: #{tpu_custom_call.1} parent=35 // pred_check_branch
          %501 = sbr.rel (%p499) target = $region60
        $region59: #{tpu_custom_call.1} parent=35 // pred_region
          %v502 = vld [vmem:[#allocation2] sm:$0xff]
          %v503 = vld [vmem:[#allocation2 + $0x8] sm:$0xff]
          %v504 = vld [vmem:[#allocation2 + $0x10] sm:$0xff]
          %v505 = vld [vmem:[#allocation2 + $0x18] sm:$0xff]
          %v506 = vld [vmem:[#allocation2 + $0x20] sm:$0xff]
          %v507 = vld [vmem:[#allocation2 + $0x28] sm:$0xff]
          %v508 = vld [vmem:[#allocation2 + $0x30] sm:$0xff]
          %v509 = vld [vmem:[#allocation2 + $0x38] sm:$0xff]
          %v510 = vld [vmem:[#allocation2 + $0x40] sm:$0xff]
          %v511 = vld [vmem:[#allocation2 + $0x48] sm:$0xff]
          %v512 = vld [vmem:[#allocation2 + $0x50] sm:$0xff]
          %v513 = vld [vmem:[#allocation2 + $0x58] sm:$0xff]
          %v514 = vld [vmem:[#allocation2 + $0x60] sm:$0xff]
          %v515 = vld [vmem:[#allocation2 + $0x68] sm:$0xff]
          %v516 = vld [vmem:[#allocation2 + $0x70] sm:$0xff]
          %v517 = vld [vmem:[#allocation2 + $0x78] sm:$0xff]
          %v518 = vpack.c.bf16 %v503, %v502
          %v519 = vpack.c.bf16 %v505, %v504
          %v520 = vpack.c.bf16 %v507, %v506
          %v521 = vpack.c.bf16 %v509, %v508
          %v522 = vpack.c.bf16 %v511, %v510
          %v523 = vpack.c.bf16 %v513, %v512
          %v524 = vpack.c.bf16 %v515, %v514
          %v525 = vpack.c.bf16 %v517, %v516
          %v542 = vunpack.c.l.b16 %v281
          %v543 = vunpack.c.l.b16 %v282
          %v544 = vunpack.c.l.b16 %v283
          %v545 = vunpack.c.l.b16 %v284
          %v546 = vunpack.c.l.b16 %v285
          %v547 = vunpack.c.l.b16 %v286
          %v548 = vunpack.c.l.b16 %v287
          %v549 = vunpack.c.l.b16 %v288
          %v550 = vunpack.c.l.b16 %v289
          %v551 = vunpack.c.l.b16 %v290
          %v552 = vunpack.c.l.b16 %v291
          %v553 = vunpack.c.l.b16 %v292
          %v554 = vunpack.c.l.b16 %v293
          %v555 = vunpack.c.l.b16 %v294
          %v556 = vunpack.c.l.b16 %v295
          %v557 = vunpack.c.l.b16 %v296
          %v558 = vpack.c.b16 %v543, %v542
          %v559 = vpack.c.b16 %v545, %v544
          %v560 = vpack.c.b16 %v547, %v546
          %v561 = vpack.c.b16 %v549, %v548
          %v562 = vpack.c.b16 %v551, %v550
          %v563 = vpack.c.b16 %v553, %v552
          %v564 = vpack.c.b16 %v555, %v554
          %v565 = vpack.c.b16 %v557, %v556
          %574 = vmatpush.bf16.msra.mxu0 %v565
          %575 = vmatpush.bf16.msra.mxu0 %v564
          %576 = vmatpush.bf16.msra.mxu0 %v563
          %577 = vmatpush.bf16.msra.mxu0 %v562
          %578 = vmatpush.bf16.msra.mxu0 %v561
          %579 = vmatpush.bf16.msra.mxu0 %v560
          %580 = vmatpush.bf16.msra.mxu0 %v559
          %581 = vmatpush.bf16.msra.mxu0 %v558
          %582 = vmatmul.bf16.gmra.mxu0 %v518
          %v583 = vpop.f32.mrf.mxu0
          %v584 = vadd.f32 0.0, %v583
          %v585 = vpop.f32.mrf.mxu0
          %v586 = vadd.f32 0.0, %v585
          %587 = vmatmul.bf16.gmra.mxu0 %v519
          %v588 = vpop.f32.mrf.mxu0
          %v589 = vadd.f32 0.0, %v588
          %v590 = vpop.f32.mrf.mxu0
          %v591 = vadd.f32 0.0, %v590
          %592 = vmatmul.bf16.gmra.mxu0 %v520
          %v593 = vpop.f32.mrf.mxu0
          %v594 = vadd.f32 0.0, %v593
          %v595 = vpop.f32.mrf.mxu0
          %v596 = vadd.f32 0.0, %v595
          %597 = vmatmul.bf16.gmra.mxu0 %v521
          %v598 = vpop.f32.mrf.mxu0
          %v599 = vadd.f32 0.0, %v598
          %v600 = vpop.f32.mrf.mxu0
          %v601 = vadd.f32 0.0, %v600
          %602 = vmatmul.bf16.gmra.mxu0 %v522
          %v603 = vpop.f32.mrf.mxu0
          %v604 = vadd.f32 0.0, %v603
          %v605 = vpop.f32.mrf.mxu0
          %v606 = vadd.f32 0.0, %v605
          %607 = vmatmul.bf16.gmra.mxu0 %v523
          %v608 = vpop.f32.mrf.mxu0
          %v609 = vadd.f32 0.0, %v608
          %v610 = vpop.f32.mrf.mxu0
          %v611 = vadd.f32 0.0, %v610
          %612 = vmatmul.bf16.gmra.mxu0 %v524
          %v613 = vpop.f32.mrf.mxu0
          %v614 = vadd.f32 0.0, %v613
          %v615 = vpop.f32.mrf.mxu0
          %v616 = vadd.f32 0.0, %v615
          %617 = vmatmul.bf16.gmra.mxu0 %v525
          %v618 = vpop.f32.mrf.mxu0
          %v619 = vadd.f32 0.0, %v618
          %v620 = vpop.f32.mrf.mxu0
          %v621 = vadd.f32 0.0, %v620
          %622 = vdwg.mxu0
          %v623 = vld [vmem:[#allocation6] sm:$0xf]
          %v624 = vld [vmem:[#allocation6 + $0x4] sm:$0xf]
          %v625 = vld [vmem:[#allocation6 + $0x8] sm:$0xf]
          %v626 = vld [vmem:[#allocation6 + $0xc] sm:$0xf]
          %v627 = vld [vmem:[#allocation6 + $0x10] sm:$0xf]
          %v628 = vld [vmem:[#allocation6 + $0x14] sm:$0xf]
          %v629 = vld [vmem:[#allocation6 + $0x18] sm:$0xf]
          %v630 = vld [vmem:[#allocation6 + $0x1c] sm:$0xf]
          %v631 = vld [vmem:[#allocation6 + $0x20] sm:$0xf]
          %v632 = vld [vmem:[#allocation6 + $0x24] sm:$0xf]
          %v633 = vld [vmem:[#allocation6 + $0x28] sm:$0xf]
          %v634 = vld [vmem:[#allocation6 + $0x2c] sm:$0xf]
          %v635 = vld [vmem:[#allocation6 + $0x30] sm:$0xf]
          %v636 = vld [vmem:[#allocation6 + $0x34] sm:$0xf]
          %v637 = vld [vmem:[#allocation6 + $0x38] sm:$0xf]
          %v638 = vld [vmem:[#allocation6 + $0x3c] sm:$0xf]
          %v639 = vpack.c.bf16 %v586, %v584
          %v640 = vpack.c.bf16 %v591, %v589
          %v641 = vpack.c.bf16 %v596, %v594
          %v642 = vpack.c.bf16 %v601, %v599
          %v643 = vpack.c.bf16 %v606, %v604
          %v644 = vpack.c.bf16 %v611, %v609
          %v645 = vpack.c.bf16 %v616, %v614
          %v646 = vpack.c.bf16 %v621, %v619
          %v648 = vperm.slane %v297, 0
          %v666 = vunpack.c.l.b16 %v623
          %v667 = vunpack.c.l.b16 %v624
          %v668 = vunpack.c.l.b16 %v625
          %v669 = vunpack.c.l.b16 %v626
          %v670 = vunpack.c.l.b16 %v627
          %v671 = vunpack.c.l.b16 %v628
          %v672 = vunpack.c.l.b16 %v629
          %v673 = vunpack.c.l.b16 %v630
          %v674 = vunpack.c.l.b16 %v631
          %v675 = vunpack.c.l.b16 %v632
          %v676 = vunpack.c.l.b16 %v633
          %v677 = vunpack.c.l.b16 %v634
          %v678 = vunpack.c.l.b16 %v635
          %v679 = vunpack.c.l.b16 %v636
          %v680 = vunpack.c.l.b16 %v637
          %v681 = vunpack.c.l.b16 %v638
          %v682 = vpack.c.b16 %v667, %v666
          %v683 = vpack.c.b16 %v669, %v668
          %v684 = vpack.c.b16 %v671, %v670
          %v685 = vpack.c.b16 %v673, %v672
          %v686 = vpack.c.b16 %v675, %v674
          %v687 = vpack.c.b16 %v677, %v676
          %v688 = vpack.c.b16 %v679, %v678
          %v689 = vpack.c.b16 %v681, %v680
          %698 = vmatpush.bf16.msra.mxu0 %v646
          %699 = vmatpush.bf16.msra.mxu0 %v645
          %700 = vmatpush.bf16.msra.mxu0 %v644
          %701 = vmatpush.bf16.msra.mxu0 %v643
          %702 = vmatpush.bf16.msra.mxu0 %v642
          %703 = vmatpush.bf16.msra.mxu0 %v641
          %704 = vmatpush.bf16.msra.mxu0 %v640
          %705 = vmatpush.bf16.msra.mxu0 %v639
          %706 = vmatmul.bf16.gmra.mxu0 %v682
          %v707 = vpop.f32.mrf.mxu0
          %v708 = vadd.f32 %v648, %v707
          %v709 = vpop.f32.mrf.mxu0
          %v710 = vadd.f32 %v648, %v709
          %711 = vmatmul.bf16.gmra.mxu0 %v683
          %v712 = vpop.f32.mrf.mxu0
          %v713 = vadd.f32 %v648, %v712
          %v714 = vpop.f32.mrf.mxu0
          %v715 = vadd.f32 %v648, %v714
          %716 = vmatmul.bf16.gmra.mxu0 %v684
          %v717 = vpop.f32.mrf.mxu0
          %v718 = vadd.f32 %v648, %v717
          %v719 = vpop.f32.mrf.mxu0
          %v720 = vadd.f32 %v648, %v719
          %721 = vmatmul.bf16.gmra.mxu0 %v685
          %v722 = vpop.f32.mrf.mxu0
          %v723 = vadd.f32 %v648, %v722
          %v724 = vpop.f32.mrf.mxu0
          %v725 = vadd.f32 %v648, %v724
          %726 = vmatmul.bf16.gmra.mxu0 %v686
          %v727 = vpop.f32.mrf.mxu0
          %v728 = vadd.f32 %v648, %v727
          %v729 = vpop.f32.mrf.mxu0
          %v730 = vadd.f32 %v648, %v729
          %731 = vmatmul.bf16.gmra.mxu0 %v687
          %v732 = vpop.f32.mrf.mxu0
          %v733 = vadd.f32 %v648, %v732
          %v734 = vpop.f32.mrf.mxu0
          %v735 = vadd.f32 %v648, %v734
          %736 = vmatmul.bf16.gmra.mxu0 %v688
          %v737 = vpop.f32.mrf.mxu0
          %v738 = vadd.f32 %v648, %v737
          %v739 = vpop.f32.mrf.mxu0
          %v740 = vadd.f32 %v648, %v739
          %741 = vmatmul.bf16.gmra.mxu0 %v689
          %v742 = vpop.f32.mrf.mxu0
          %v743 = vadd.f32 %v648, %v742
          %v744 = vpop.f32.mrf.mxu0
          %v745 = vadd.f32 %v648, %v744
          %746 = vdwg.mxu0
          %v747 = vmax.f32 %v708, 0.0
          %v748 = vmax.f32 %v710, 0.0
          %v749 = vmax.f32 %v713, 0.0
          %v750 = vmax.f32 %v715, 0.0
          %v751 = vmax.f32 %v718, 0.0
          %v752 = vmax.f32 %v720, 0.0
          %v753 = vmax.f32 %v723, 0.0
          %v754 = vmax.f32 %v725, 0.0
          %v755 = vmax.f32 %v728, 0.0
          %v756 = vmax.f32 %v730, 0.0
          %v757 = vmax.f32 %v733, 0.0
          %v758 = vmax.f32 %v735, 0.0
          %v759 = vmax.f32 %v738, 0.0
          %v760 = vmax.f32 %v740, 0.0
          %v761 = vmax.f32 %v743, 0.0
          %v762 = vmax.f32 %v745, 0.0
          %763 = vst [vmem:[#allocation2] sm:$0xff] %v747
          %764 = vst [vmem:[#allocation2 + $0x8] sm:$0xff] %v748
          %765 = vst [vmem:[#allocation2 + $0x10] sm:$0xff] %v749
          %766 = vst [vmem:[#allocation2 + $0x18] sm:$0xff] %v750
          %767 = vst [vmem:[#allocation2 + $0x20] sm:$0xff] %v751
          %768 = vst [vmem:[#allocation2 + $0x28] sm:$0xff] %v752
          %769 = vst [vmem:[#allocation2 + $0x30] sm:$0xff] %v753
          %770 = vst [vmem:[#allocation2 + $0x38] sm:$0xff] %v754
          %771 = vst [vmem:[#allocation2 + $0x40] sm:$0xff] %v755
          %772 = vst [vmem:[#allocation2 + $0x48] sm:$0xff] %v756
          %773 = vst [vmem:[#allocation2 + $0x50] sm:$0xff] %v757
          %774 = vst [vmem:[#allocation2 + $0x58] sm:$0xff] %v758
          %775 = vst [vmem:[#allocation2 + $0x60] sm:$0xff] %v759
          %776 = vst [vmem:[#allocation2 + $0x68] sm:$0xff] %v760
          %777 = vst [vmem:[#allocation2 + $0x70] sm:$0xff] %v761
          %778 = vst [vmem:[#allocation2 + $0x78] sm:$0xff] %v762
        $region60: #{tpu_custom_call.1} parent=35 // pred_fallthru
          _
        %v779 = vld [vmem:[#allocation2] sm:$0xff]
        %v780 = vld [vmem:[#allocation2 + $0x8] sm:$0xff]
        %v781 = vld [vmem:[#allocation2 + $0x10] sm:$0xff]
        %v782 = vld [vmem:[#allocation2 + $0x18] sm:$0xff]
        %v783 = vld [vmem:[#allocation2 + $0x20] sm:$0xff]
        %v784 = vld [vmem:[#allocation2 + $0x28] sm:$0xff]
        %v785 = vld [vmem:[#allocation2 + $0x30] sm:$0xff]
        %v786 = vld [vmem:[#allocation2 + $0x38] sm:$0xff]
        %v787 = vld [vmem:[#allocation2 + $0x40] sm:$0xff]
        %v788 = vld [vmem:[#allocation2 + $0x48] sm:$0xff]
        %v789 = vld [vmem:[#allocation2 + $0x50] sm:$0xff]
        %v790 = vld [vmem:[#allocation2 + $0x58] sm:$0xff]
        %v791 = vld [vmem:[#allocation2 + $0x60] sm:$0xff]
        %v792 = vld [vmem:[#allocation2 + $0x68] sm:$0xff]
        %v793 = vld [vmem:[#allocation2 + $0x70] sm:$0xff]
        %v794 = vld [vmem:[#allocation2 + $0x78] sm:$0xff]
        %795 = vst [vmem:[%s280] sm:$0xff] %v779
        %796 = vst [vmem:[%s280 + $0x8] sm:$0xff] %v780
        %797 = vst [vmem:[%s280 + $0x10] sm:$0xff] %v781
        %798 = vst [vmem:[%s280 + $0x18] sm:$0xff] %v782
        %799 = vst [vmem:[%s280 + $0x20] sm:$0xff] %v783
        %800 = vst [vmem:[%s280 + $0x28] sm:$0xff] %v784
        %801 = vst [vmem:[%s280 + $0x30] sm:$0xff] %v785
        %802 = vst [vmem:[%s280 + $0x38] sm:$0xff] %v786
        %803 = vst [vmem:[%s280 + $0x40] sm:$0xff] %v787
        %804 = vst [vmem:[%s280 + $0x48] sm:$0xff] %v788
        %805 = vst [vmem:[%s280 + $0x50] sm:$0xff] %v789
        %806 = vst [vmem:[%s280 + $0x58] sm:$0xff] %v790
        %807 = vst [vmem:[%s280 + $0x60] sm:$0xff] %v791
        %808 = vst [vmem:[%s280 + $0x68] sm:$0xff] %v792
        %809 = vst [vmem:[%s280 + $0x70] sm:$0xff] %v793
        %810 = vst [vmem:[%s280 + $0x78] sm:$0xff] %v794
        %s811 = sand.u32 %s122, 1
        %s812 = scalar_lea.sflag [#allocation5], %s811
        %s813 = sand.u32 %s122, 1
        %s814 = smul.addr %s813, 128
        %s815 = scalar_lea.vmem [#allocation10], %s814
        // Predicated region
        $region61: #{tpu_custom_call.1} parent=35 // pred_check
          %p816 = pneg %p132
        $region62: #{tpu_custom_call.1} parent=35 // pred_check_branch
          %818 = sbr.rel (%p816) target = $region64
        $region63: #{tpu_custom_call.1} parent=35 // pred_region
          %820 = vsyncadd %s812, 0
          %s821 = smul.addr %s20, 8
          %s822 = scalar_lea.hbm %s4, %s821
          %s823 = sshll.u32 %s815, 4
          %s824 = int_to_ptr.vmem [resolvable:$true] %s823
          %s825 = sshll.u32 %s822, 4
          %s826 = int_to_ptr.hbm [resolvable:$true] %s825
          %831 = dma.vmem_to_hbm [thread:$0]  %s824, 2048, %s826, %s812, 128, 512, 8
        $region64: #{tpu_custom_call.1} parent=35 // pred_fallthru
          _
      $region36: #{tpu_custom_call.1} parent=5 // pred_fallthru
        _
      %p832 = scmp.le.s32.totalorder 2, %s15
      // Predicated region
      $region65: #{tpu_custom_call.1} parent=5 // pred_check
        %p833 = pneg %p832
      $region66: #{tpu_custom_call.1} parent=5 // pred_check_branch
        %835 = sbr.rel (%p833) target = $region68
      $region67: #{tpu_custom_call.1} parent=5 // pred_region
        %s836 = ssub.s32 %s15, 2
        // Predicated region
        $region69: #{tpu_custom_call.1} parent=67 // pred_check
          %p837 = pneg %p138
        $region70: #{tpu_custom_call.1} parent=67 // pred_check_branch
          %839 = sbr.rel (%p837) target = $region72
        $region71: #{tpu_custom_call.1} parent=67 // pred_region
          %s840 = sand.u32 %s123, 1
          %s841 = scalar_lea.sflag [#allocation5], %s840
          %s842 = sand.u32 %s123, 1
          %s843 = smul.addr %s842, 128
          %s844 = scalar_lea.vmem [#allocation10], %s843
          %846 = dma.done %s841, 2048
        $region72: #{tpu_custom_call.1} parent=67 // pred_fallthru
          _
      $region68: #{tpu_custom_call.1} parent=5 // pred_fallthru
        _
    $region6: #{tpu_custom_call.1} parent=1 // loop_footer
      %s19 = sadd.s32 1, %s15
    $region7: #{tpu_custom_call.1} parent=1 // loop_footer_branch
      %14 = sbr.rel target = $region3
    $region8: #{tpu_custom_call.1} parent=1 // loop_exit
      _
    %847 = vsyncpa [#allocation4], 1
    %s848 = scalar_lea.sflag [#allocation4], 1
    %849 = vsyncpa %s848, 1
    %850 = vsyncpa [#allocation7], 1
    %851 = vsyncpa [#allocation5], 1
    %s852 = scalar_lea.sflag [#allocation5], 1
    %853 = vsyncpa %s852, 1

</llo_original>
